<compile_context>
chip_gen: v7x
topology: tpu7x:2x2x1
jax: 0.10.0
libtpu: 0.0.40
codegen_flags: <defaults>
</compile_context>

<pallas_src>
import functools

import jax
import jax.numpy as jnp
from jax.experimental import pallas as pl
from jax.experimental.pallas import tpu as pltpu


def _round_up(x, m):
    return ((x + m - 1) // m) * m


def mlp_kernel(x_ref, w1_ref, b1_ref, w2_ref, b2_ref, w3_ref, b3_ref, o_ref):
    # x arrives f32 straight from HBM; cast to bf16 in-kernel (VPU has slack)
    # so the wrapper doesn't spend an extra HBM read+write on the conversion.
    x = x_ref[...].astype(jnp.bfloat16)
    h1 = jnp.dot(x, w1_ref[...], preferred_element_type=jnp.float32) + b1_ref[...]
    h1 = jnp.maximum(h1, 0.0).astype(jnp.bfloat16)
    h2 = jnp.dot(h1, w2_ref[...], preferred_element_type=jnp.float32) + b2_ref[...]
    h2 = jnp.maximum(h2, 0.0).astype(jnp.bfloat16)
    out = jnp.dot(h2, w3_ref[...], preferred_element_type=jnp.float32) + b3_ref[...]
    o_ref[...] = out.astype(o_ref.dtype)


def _batch_tiling(B, in_features, out_pad, target=1024):
    """Pick (tile_b, B_pad).

    - tiny B (<=256): one tile, rounded to the f32 sublane multiple (8).
    - otherwise: tiles are multiples of 256 rows (fills the 256-row MXU M-dim on
      v6e/v7x), ~`target` rows each (amortizes the ~0.35us per-grid-step fixed
      overhead), and there are >= 2 tiles so v7x's two TensorCores both get work
      via dimension_semantics=("parallel",).  Padding waste beyond 256-alignment
      is bounded by (n_tiles - 1) 256-row blocks.
    - tile_b is capped so the per-tile VMEM footprint (double-buffered f32 x/out
      tiles + f32 h1/h2 temporaries) stays well under the 32 MiB scoped limit
      (v7x only has 64 MiB physical VMEM).
    """
    # VMEM bytes per batch row: double-buffered f32 x + out tiles, f32 h1/h2.
    per_row = 4 * (2 * (in_features + out_pad) + 256 + 128)
    vmem_rows = max(256, ((16 << 20) // per_row) // 256 * 256)
    target = min(target, vmem_rows)

    if B <= 256:
        t = _round_up(max(B, 1), 8)
        return t, t

    blocks = pl.cdiv(B, 256)                       # batch in units of 256 rows
    n_tiles = max(2, pl.cdiv(blocks, max(1, target // 256)))
    tile_b = pl.cdiv(blocks, n_tiles) * 256
    return tile_b, _round_up(B, tile_b)


@functools.partial(
    jax.jit, static_argnames=("out_features", "target_tile_b", "out_dtype"))
def mlp_forward(x, kparams, *, out_features, target_tile_b=1024,
                out_dtype=jnp.float32):
    """x: (B, in_features) f32. kparams: output of prepare_params()."""
    B, in_features = x.shape
    w1, b1 = kparams["w1"], kparams["b1"]
    w2, b2 = kparams["w2"], kparams["b2"]
    w3, b3 = kparams["w3"], kparams["b3"]
    h1_dim = w1.shape[1]
    h2_dim = w2.shape[1]
    out_pad = w3.shape[1]          # already lane-dense (multiple of 128)

    tile_b, B_pad = _batch_tiling(B, in_features, out_pad, target=target_tile_b)
    if B_pad != B:
        # Single pass over x; padded rows are row-independent garbage-free zeros.
        x = jnp.zeros((B_pad, in_features), x.dtype).at[:B, :].set(x)

    grid = (B_pad // tile_b,)

    # Weights/biases are resident across the grid (constant block index).
    # If in/out features ever get large, consider pipeline_mode=pl.Buffered(1)
    # on these to avoid a redundant second buffer on v7x's half-size VMEM.
    def const_spec(shape):
        return pl.BlockSpec(shape, lambda i: (0, 0))

    flops = 2 * B_pad * (in_features * h1_dim + h1_dim * h2_dim + h2_dim * out_pad)
    bytes_accessed = (
        B_pad * in_features * 4                            # f32 x in
        + B_pad * out_pad * jnp.dtype(out_dtype).itemsize  # output
        + (w1.size + w2.size + w3.size) * 2                # bf16 weights
        + (b1.size + b2.size + b3.size) * 4                # f32 biases
    )

    out_padded = pl.pallas_call(
        mlp_kernel,
        out_shape=jax.ShapeDtypeStruct((B_pad, out_pad), out_dtype),
        grid_spec=pltpu.PrefetchScalarGridSpec(
            num_scalar_prefetch=0,
            grid=grid,
            in_specs=[
                pl.BlockSpec((tile_b, in_features), lambda i: (i, 0)),  # x tile
                const_spec(w1.shape), const_spec(b1.shape),
                const_spec(w2.shape), const_spec(b2.shape),
                const_spec(w3.shape), const_spec(b3.shape),
            ],
            out_specs=pl.BlockSpec((tile_b, out_pad), lambda i: (i, 0)),
        ),
        compiler_params=pltpu.CompilerParams(
            dimension_semantics=("parallel",),     # batch tiles shard across TCs
            vmem_limit_bytes=32 * 1024 * 1024,     # safe on v5e/v6e/v7x
        ),
        cost_estimate=pl.CostEstimate(
            flops=flops, transcendentals=0, bytes_accessed=bytes_accessed),
    )(x, w1, b1, w2, b2, w3, b3)

    # Strip batch + lane padding.
    return out_padded[:B, :out_features]


def init_params(key, in_features, out_features):
    """Deterministic f32 init mirroring nn.Linear's uniform(-1/sqrt(fan_in), +)."""
    def linear(key, fan_in, fan_out):
        kw, kb = jax.random.split(key)
        bound = 1.0 / jnp.sqrt(jnp.float32(fan_in))
        # Stored as (in, out) — the transpose of PyTorch's (out, in) weight.
        w = jax.random.uniform(kw, (fan_in, fan_out), jnp.float32, -bound, bound)
        b = jax.random.uniform(kb, (1, fan_out), jnp.float32, -bound, bound)
        return w, b

    k1, k2, k3 = jax.random.split(key, 3)
    w1, b1 = linear(k1, in_features, 256)
    w2, b2 = linear(k2, 256, 128)
    w3, b3 = linear(k3, 128, out_features)
    return {"w1": w1, "b1": b1, "w2": w2, "b2": b2, "w3": w3, "b3": b3}


def prepare_params(params):
    """One-time conversion to kernel layout: bf16 (in,out) weights, f32 (1,out)
    biases, output layer zero-padded to a lane-dense multiple-of-128 width.
    Call once and reuse -> zero per-call wrapper work on the parameters."""
    w3, b3 = params["w3"], params["b3"]
    out_features = w3.shape[1]
    out_pad = _round_up(out_features, 128)
    if out_pad != out_features:
        w3 = jnp.zeros((w3.shape[0], out_pad), w3.dtype).at[:, :out_features].set(w3)
        b3 = jnp.zeros((1, out_pad), b3.dtype).at[:, :out_features].set(b3)
    kparams = {
        "w1": params["w1"].astype(jnp.bfloat16),
        "b1": params["b1"].astype(jnp.float32),
        "w2": params["w2"].astype(jnp.bfloat16),
        "b2": params["b2"].astype(jnp.float32),
        "w3": w3.astype(jnp.bfloat16),
        "b3": b3.astype(jnp.float32),
    }
    kparams = jax.tree_util.tree_map(jnp.asarray, kparams)
    return kparams, out_features


# get_total_l0_reg() in the PyTorch module is a constant 0.0 — no kernel needed.
def get_total_l0_reg():
    return jnp.float32(0.0)


if __name__ == "__main__":
    key = jax.random.PRNGKey(0)
    kx, kp = jax.random.split(key)

    batch = 8
    in_features = 32
    out_features = 16

    x = jax.random.normal(kx, (batch, in_features), jnp.float32)
    params = init_params(kp, in_features, out_features)
    kparams, out_f = prepare_params(params)          # one-time cast + pad

    out = mlp_forward(x, kparams, out_features=out_f)
    out = jax.block_until_ready(out)

    # Pure-JAX reference mirroring the kernel's bf16-operand / f32-accumulate math.
    # NOTE: bf16 MXU operands intentionally diverge from a pure-f32 PyTorch MLP.
    def ref(x, p):
        xb = x.astype(jnp.bfloat16)
        w1b = p["w1"].astype(jnp.bfloat16)
        w2b = p["w2"].astype(jnp.bfloat16)
        w3b = p["w3"].astype(jnp.bfloat16)
        h1 = jnp.maximum(
            jnp.dot(xb, w1b, preferred_element_type=jnp.float32) + p["b1"], 0.0
        ).astype(jnp.bfloat16)
        h2 = jnp.maximum(
            jnp.dot(h1, w2b, preferred_element_type=jnp.float32) + p["b2"], 0.0
        ).astype(jnp.bfloat16)
        return jnp.dot(h2, w3b, preferred_element_type=jnp.float32) + p["b3"]

    expected = ref(x, params)
    assert out.shape == (batch, out_features)
    assert jnp.allclose(out, expected, atol=2e-2, rtol=2e-2)

    print("KERNEL_OK")
</pallas_src>

<mosaic_0001>
module attributes {stable_mosaic.version = 11 : i64} {
  func.func @mlp_kernel(%arg0: i32, %arg1: memref<8x32xf32, #tpu.memory_space<vmem>>, %arg2: memref<32x256xbf16, #tpu.memory_space<vmem>>, %arg3: memref<1x256xf32, #tpu.memory_space<vmem>>, %arg4: memref<256x128xbf16, #tpu.memory_space<vmem>>, %arg5: memref<1x128xf32, #tpu.memory_space<vmem>>, %arg6: memref<128x128xbf16, #tpu.memory_space<vmem>>, %arg7: memref<1x128xf32, #tpu.memory_space<vmem>>, %arg8: memref<8x128xf32, #tpu.memory_space<vmem>>) attributes {dimension_semantics = [#tpu.dimension_semantics<parallel>], iteration_bounds = array<i64: 1>, scalar_prefetch = 0 : i64, scratch_operands = 0 : i64, tpu.core_type = #tpu.core_type<tc>, window_params = [{transform_indices = @transform_0, window_bounds = array<i64: 8, 32>}, {pipeline_mode = #tpu.pipeline_mode<synchronous>, transform_indices = @transform_1, window_bounds = array<i64: 32, 256>}, {pipeline_mode = #tpu.pipeline_mode<synchronous>, transform_indices = @transform_2, window_bounds = array<i64: 1, 256>}, {pipeline_mode = #tpu.pipeline_mode<synchronous>, transform_indices = @transform_3, window_bounds = array<i64: 256, 128>}, {pipeline_mode = #tpu.pipeline_mode<synchronous>, transform_indices = @transform_4, window_bounds = array<i64: 1, 128>}, {pipeline_mode = #tpu.pipeline_mode<synchronous>, transform_indices = @transform_5, window_bounds = array<i64: 128, 128>}, {pipeline_mode = #tpu.pipeline_mode<synchronous>, transform_indices = @transform_6, window_bounds = array<i64: 1, 128>}, {transform_indices = @transform_7, window_bounds = array<i64: 8, 128>}]} {
    %c0 = arith.constant 0 : index
    %c0_0 = arith.constant 0 : index
    %0 = vector.load %arg1[%c0, %c0_0] : memref<8x32xf32, #tpu.memory_space<vmem>>, vector<8x32xf32>
    %1 = arith.truncf %0 : vector<8x32xf32> to vector<8x32xbf16>
    %c0_1 = arith.constant 0 : index
    %c0_2 = arith.constant 0 : index
    %2 = vector.load %arg2[%c0_1, %c0_2] : memref<32x256xbf16, #tpu.memory_space<vmem>>, vector<32x256xbf16>
    %cst = arith.constant dense<0.000000e+00> : vector<8x256xf32>
    %3 = tpu.matmul %1, %2, %cst {dimension_numbers = #tpu.dot_dimension_numbers<[1], [0], [0], [1], [0, 0, 1, 1], [], []>} : vector<8x32xbf16>, vector<32x256xbf16>, vector<8x256xf32> -> vector<8x256xf32>
    %c0_3 = arith.constant 0 : index
    %c0_4 = arith.constant 0 : index
    %4 = vector.load %arg3[%c0_3, %c0_4] : memref<1x256xf32, #tpu.memory_space<vmem>>, vector<1x256xf32>
    %5 = vector.broadcast %4 : vector<1x256xf32> to vector<8x256xf32>
    %6 = arith.addf %3, %5 : vector<8x256xf32>
    %cst_5 = arith.constant 0.000000e+00 : f32
    %7 = vector.broadcast %cst_5 : f32 to vector<8x256xf32>
    %8 = arith.maximumf %6, %7 : vector<8x256xf32>
    %9 = arith.truncf %8 : vector<8x256xf32> to vector<8x256xbf16>
    %c0_6 = arith.constant 0 : index
    %c0_7 = arith.constant 0 : index
    %10 = vector.load %arg4[%c0_6, %c0_7] : memref<256x128xbf16, #tpu.memory_space<vmem>>, vector<256x128xbf16>
    %cst_8 = arith.constant dense<0.000000e+00> : vector<8x128xf32>
    %11 = tpu.matmul %9, %10, %cst_8 {dimension_numbers = #tpu.dot_dimension_numbers<[1], [0], [0], [1], [0, 0, 1, 1], [], []>} : vector<8x256xbf16>, vector<256x128xbf16>, vector<8x128xf32> -> vector<8x128xf32>
    %c0_9 = arith.constant 0 : index
    %c0_10 = arith.constant 0 : index
    %12 = vector.load %arg5[%c0_9, %c0_10] : memref<1x128xf32, #tpu.memory_space<vmem>>, vector<1x128xf32>
    %13 = vector.broadcast %12 : vector<1x128xf32> to vector<8x128xf32>
    %14 = arith.addf %11, %13 : vector<8x128xf32>
    %cst_11 = arith.constant 0.000000e+00 : f32
    %15 = vector.broadcast %cst_11 : f32 to vector<8x128xf32>
    %16 = arith.maximumf %14, %15 : vector<8x128xf32>
    %17 = arith.truncf %16 : vector<8x128xf32> to vector<8x128xbf16>
    %c0_12 = arith.constant 0 : index
    %c0_13 = arith.constant 0 : index
    %18 = vector.load %arg6[%c0_12, %c0_13] : memref<128x128xbf16, #tpu.memory_space<vmem>>, vector<128x128xbf16>
    %cst_14 = arith.constant dense<0.000000e+00> : vector<8x128xf32>
    %19 = tpu.matmul %17, %18, %cst_14 {dimension_numbers = #tpu.dot_dimension_numbers<[1], [0], [0], [1], [0, 0, 1, 1], [], []>} : vector<8x128xbf16>, vector<128x128xbf16>, vector<8x128xf32> -> vector<8x128xf32>
    %c0_15 = arith.constant 0 : index
    %c0_16 = arith.constant 0 : index
    %20 = vector.load %arg7[%c0_15, %c0_16] : memref<1x128xf32, #tpu.memory_space<vmem>>, vector<1x128xf32>
    %21 = vector.broadcast %20 : vector<1x128xf32> to vector<8x128xf32>
    %22 = arith.addf %19, %21 : vector<8x128xf32>
    %c0_17 = arith.constant 0 : index
    %c0_18 = arith.constant 0 : index
    %23 = vector.load %arg8[%c0_17, %c0_18] : memref<8x128xf32, #tpu.memory_space<vmem>>, vector<8x128xf32>
    tpu.vector_store %arg8[%c0_17, %c0_18], %22 {strides = array<i32>} : memref<8x128xf32, #tpu.memory_space<vmem>>, vector<8x128xf32>,
    return
  }
  func.func @transform_0(%arg0: i32) -> (i32, i32) {
    %c0_i32 = arith.constant 0 : i32
    %c0_i32_0 = arith.constant 0 : i32
    return %arg0, %c0_i32 : i32, i32
  }
  func.func @transform_1(%arg0: i32) -> (i32, i32) {
    %c0_i32 = arith.constant 0 : i32
    %c0_i32_0 = arith.constant 0 : i32
    %c0_i32_1 = arith.constant 0 : i32
    return %c0_i32, %c0_i32_0 : i32, i32
  }
  func.func @transform_2(%arg0: i32) -> (i32, i32) {
    %c0_i32 = arith.constant 0 : i32
    %c0_i32_0 = arith.constant 0 : i32
    %c0_i32_1 = arith.constant 0 : i32
    return %c0_i32, %c0_i32_0 : i32, i32
  }
  func.func @transform_3(%arg0: i32) -> (i32, i32) {
    %c0_i32 = arith.constant 0 : i32
    %c0_i32_0 = arith.constant 0 : i32
    %c0_i32_1 = arith.constant 0 : i32
    return %c0_i32, %c0_i32_0 : i32, i32
  }
  func.func @transform_4(%arg0: i32) -> (i32, i32) {
    %c0_i32 = arith.constant 0 : i32
    %c0_i32_0 = arith.constant 0 : i32
    %c0_i32_1 = arith.constant 0 : i32
    return %c0_i32, %c0_i32_0 : i32, i32
  }
  func.func @transform_5(%arg0: i32) -> (i32, i32) {
    %c0_i32 = arith.constant 0 : i32
    %c0_i32_0 = arith.constant 0 : i32
    %c0_i32_1 = arith.constant 0 : i32
    return %c0_i32, %c0_i32_0 : i32, i32
  }
  func.func @transform_6(%arg0: i32) -> (i32, i32) {
    %c0_i32 = arith.constant 0 : i32
    %c0_i32_0 = arith.constant 0 : i32
    %c0_i32_1 = arith.constant 0 : i32
    return %c0_i32, %c0_i32_0 : i32, i32
  }
  func.func @transform_7(%arg0: i32) -> (i32, i32) {
    %c0_i32 = arith.constant 0 : i32
    %c0_i32_0 = arith.constant 0 : i32
    return %arg0, %c0_i32 : i32, i32
  }
}

</mosaic_0001>

<llo_original>
// kernel: mlp_forward.1
$region0: #{mlp_forward.1}
  #allocation0 [shape = 'u32[]', space=smem, size = 0x4, offset = 0x4, fixed_abs, tag = 'smem constant byte address 0x4 - core index']
  #allocation1 [shape = 'u32[144,128]{1,0:T(1,128)}', space=vmem, size = 0x12000, scoped, tag = 'internal scratch']
  %s0 = inlined_call_operand.hbm [shape: f32[8,32], index: 0, kind: input, shape index: {}]
  %s1 = inlined_call_operand.hbm [shape: bf16[32,256], index: 1, kind: input, shape index: {}]
  %s2 = inlined_call_operand.vmem [shape: f32[1,256], index: 2, kind: input, shape index: {}]
  %s3 = inlined_call_operand.hbm [shape: bf16[256,128], index: 3, kind: input, shape index: {}]
  %s4 = inlined_call_operand.vmem [shape: f32[1,128], index: 4, kind: input, shape index: {}]
  %s5 = inlined_call_operand.hbm [shape: bf16[128,128], index: 5, kind: input, shape index: {}]
  %s6 = inlined_call_operand.vmem [shape: f32[1,128], index: 6, kind: input, shape index: {}]
  %s7 = inlined_call_operand.hbm [shape: f32[8,128], index: 7, kind: output, shape index: {}]
  %s8 = sld [smem:[#allocation0]]
  $region54: #{mlp_forward.1} parent=0
    _
  %s10 = ssub.s32 1, %s8
  %s11 = scalar_select 0, %s10, %s8
  $region1: #{mlp_forward.1} parent=0
    #allocation2 [shape = 'u8[4096]{0}', space=vmem, size = 0x1000, scoped, tag = 'input window, operand 0, single buffered']
    #allocation3 [shape = 's32[1]{0}', space=sflag, size = 0x4, scoped, tag = 'scoped memory for mlp_forward.1']
    #allocation4 [shape = 's32[1]{0}', space=sflag, size = 0x4, scoped, tag = 'scoped memory for mlp_forward.1']
    #allocation5 [shape = 'u8[16384]{0}', space=vmem, size = 0x4000, scoped, tag = 'input window, operand 1, single buffered']
    #allocation6 [shape = 's32[1]{0}', space=sflag, size = 0x4, scoped, tag = 'scoped memory for mlp_forward.1']
    #allocation7 [shape = 'u8[65536]{0}', space=vmem, size = 0x10000, scoped, tag = 'input window, operand 3, single buffered']
    #allocation8 [shape = 'u8[32768]{0}', space=vmem, size = 0x8000, scoped, tag = 'input window, operand 5, single buffered']
    #allocation9 [shape = 's32[1]{0}', space=sflag, size = 0x4, scoped, tag = 'scoped memory for mlp_forward.1']
    #allocation10 [shape = 'u8[4096]{0}', space=vmem, size = 0x1000, scoped, tag = 'output window, operand 0, single buffered']
    %12 = vsyncpa [#allocation3], 0
    %13 = vsyncpa [#allocation6], 0
    %14 = vsyncpa [#allocation9], 0
    %15 = vsyncpa [#allocation4], 0
    // Predicated region
    $region2: #{mlp_forward.1} parent=1 // pred_check
      _
    $region3: #{mlp_forward.1} parent=1 // pred_check_branch
      %17 = sbr.rel (0) target = $region5
    $region4: #{mlp_forward.1} parent=1 // pred_region
      %s19 = ssub.s32 128, 128
      %20 = vsyncadd [#allocation3], %s19
      %s22 = sshll.u32 [#allocation2], 4
      %s23 = int_to_ptr.vmem [resolvable:$true] %s22
      %25 = dma.hbm_to_vmem [thread:$0]  %s0, 128, %s23, [#allocation3]
    $region5: #{mlp_forward.1} parent=1 // pred_fallthru
      _
    // Predicated region
    $region6: #{mlp_forward.1} parent=1 // pred_check
      _
    $region7: #{mlp_forward.1} parent=1 // pred_check_branch
      %27 = sbr.rel (0) target = $region9
    $region8: #{mlp_forward.1} parent=1 // pred_region
      %s29 = ssub.s32 512, 512
      %30 = vsyncadd [#allocation6], %s29
      %s31 = sshll.u32 [#allocation5], 4
      %s32 = int_to_ptr.vmem [resolvable:$true] %s31
      %37 = dma.hbm_to_vmem [thread:$0]  %s1, 512, %s32, [#allocation6], 128, 128, 8
    $region9: #{mlp_forward.1} parent=1 // pred_fallthru
      _
    // Predicated region
    $region10: #{mlp_forward.1} parent=1 // pred_check
      _
    $region11: #{mlp_forward.1} parent=1 // pred_check_branch
      %39 = sbr.rel (0) target = $region13
    $region12: #{mlp_forward.1} parent=1 // pred_region
      _
    $region13: #{mlp_forward.1} parent=1 // pred_fallthru
      _
    // Predicated region
    $region14: #{mlp_forward.1} parent=1 // pred_check
      _
    $region15: #{mlp_forward.1} parent=1 // pred_check_branch
      %41 = sbr.rel (0) target = $region17
    $region16: #{mlp_forward.1} parent=1 // pred_region
      %s43 = ssub.s32 2048, 2048
      %44 = vsyncadd [#allocation6], %s43
      %s45 = sshll.u32 [#allocation7], 4
      %s46 = int_to_ptr.vmem [resolvable:$true] %s45
      %51 = dma.hbm_to_vmem [thread:$0]  %s3, 2048, %s46, [#allocation6], 64, 64, 4
    $region17: #{mlp_forward.1} parent=1 // pred_fallthru
      _
    // Predicated region
    $region18: #{mlp_forward.1} parent=1 // pred_check
      _
    $region19: #{mlp_forward.1} parent=1 // pred_check_branch
      %53 = sbr.rel (0) target = $region21
    $region20: #{mlp_forward.1} parent=1 // pred_region
      _
    $region21: #{mlp_forward.1} parent=1 // pred_fallthru
      _
    // Predicated region
    $region22: #{mlp_forward.1} parent=1 // pred_check
      _
    $region23: #{mlp_forward.1} parent=1 // pred_check_branch
      %55 = sbr.rel (0) target = $region25
    $region24: #{mlp_forward.1} parent=1 // pred_region
      %s57 = ssub.s32 1024, 1024
      %58 = vsyncadd [#allocation9], %s57
      %s59 = sshll.u32 [#allocation8], 4
      %s60 = int_to_ptr.vmem [resolvable:$true] %s59
      %65 = dma.hbm_to_vmem [thread:$0]  %s5, 1024, %s60, [#allocation9], 64, 64, 4
    $region25: #{mlp_forward.1} parent=1 // pred_fallthru
      _
    // Predicated region
    $region26: #{mlp_forward.1} parent=1 // pred_check
      _
    $region27: #{mlp_forward.1} parent=1 // pred_check_branch
      %67 = sbr.rel (0) target = $region29
    $region28: #{mlp_forward.1} parent=1 // pred_region
      _
    $region29: #{mlp_forward.1} parent=1 // pred_fallthru
      _
    // Predicated region
    $region30: #{mlp_forward.1} parent=1 // pred_check
      _
    $region31: #{mlp_forward.1} parent=1 // pred_check_branch
      %69 = sbr.rel (0) target = $region33
    $region32: #{mlp_forward.1} parent=1 // pred_region
      %70 = dma.done [#allocation3], 128
    $region33: #{mlp_forward.1} parent=1 // pred_fallthru
      _
    // Predicated region
    $region34: #{mlp_forward.1} parent=1 // pred_check
      _
    $region35: #{mlp_forward.1} parent=1 // pred_check_branch
      %72 = sbr.rel (0) target = $region37
    $region36: #{mlp_forward.1} parent=1 // pred_region
      %73 = dma.done [#allocation6], 512
    $region37: #{mlp_forward.1} parent=1 // pred_fallthru
      _
    // Predicated region
    $region38: #{mlp_forward.1} parent=1 // pred_check
      _
    $region39: #{mlp_forward.1} parent=1 // pred_check_branch
      %75 = sbr.rel (0) target = $region41
    $region40: #{mlp_forward.1} parent=1 // pred_region
      %76 = dma.done [#allocation6], 2048
    $region41: #{mlp_forward.1} parent=1 // pred_fallthru
      _
    // Predicated region
    $region42: #{mlp_forward.1} parent=1 // pred_check
      _
    $region43: #{mlp_forward.1} parent=1 // pred_check_branch
      %78 = sbr.rel (0) target = $region45
    $region44: #{mlp_forward.1} parent=1 // pred_region
      %79 = dma.done [#allocation9], 1024
    $region45: #{mlp_forward.1} parent=1 // pred_fallthru
      _
    %v81 = vld [vmem:[#allocation2] sm:$0xff]
    %v82 = vpack.c.bf16 %v81, %v81
    %v83 = vld [vmem:[#allocation5] sm:$0xff]
    %v84 = vld [vmem:[#allocation5 + $0x8] sm:$0xff]
    %v85 = vld [vmem:[#allocation5 + $0x10] sm:$0xff]
    %v86 = vld [vmem:[#allocation5 + $0x18] sm:$0xff]
    %v87 = vld [vmem:[%s2] sm:$0x3]
    %v89 = vlaneseq
    %v90 = vshrl.u32 %v89, 7
    %v91 = vsub.s32 0, %v90
    %v92 = vrot.slane %v87, %v91
    %v93 = vlaneseq
    %v94 = vshrl.u32 %v93, 7
    %v95 = vsub.s32 1, %v94
    %v96 = vrot.slane %v87, %v95
    %v103 = vunpack.c.l.b16 %v83
    %v104 = vunpack.c.h.b16 %v83
    %v105 = vunpack.c.l.b16 %v84
    %v106 = vunpack.c.h.b16 %v84
    %v107 = vunpack.c.l.b16 %v85
    %v108 = vunpack.c.h.b16 %v85
    %v109 = vunpack.c.l.b16 %v86
    %v110 = vunpack.c.h.b16 %v86
    %v111 = vpack.c.b16 %v105, %v103
    %v112 = vpack.c.b16 %v106, %v104
    %v113 = vpack.c.b16 %v109, %v107
    %v114 = vpack.c.b16 %v110, %v108
    %vm119 = vcmask 261120
    %v121 = vsel %vm119, %v82, 0
    %123 = vmatprep.subr.bf16.mxu0 %v112
    %124 = vmatpush1.bf16.msra.mxu0 %v111
    %125 = vmatprep.subr.bf16.mxu0 %v114
    %126 = vmatpush1.bf16.msra.mxu0 %v113
    %127 = vmatprep.subr.bf16.mxu0 0
    %128 = vmatpush1.bf16.msra.mxu0 0
    %129 = vmatprep.subr.bf16.mxu0 0
    %130 = vmatpush1.bf16.msra.mxu0 0
    %131 = vmatprep.subr.bf16.mxu0 0
    %132 = vmatpush1.bf16.msra.mxu0 0
    %133 = vmatprep.subr.bf16.mxu0 0
    %134 = vmatpush1.bf16.msra.mxu0 0
    %135 = vmatprep.subr.bf16.mxu0 0
    %136 = vmatpush1.bf16.msra.mxu0 0
    %137 = vmatprep.subr.bf16.mxu0 0
    %138 = vmatpush1.bf16.msra.mxu0 0
    %139 = vmatprep.subr.bf16.mxu0 0
    %140 = vmatpush1.bf16.msra.mxu0 0
    %141 = vmatprep.subr.bf16.mxu0 0
    %142 = vmatpush1.bf16.msra.mxu0 0
    %143 = vmatprep.subr.bf16.mxu0 0
    %144 = vmatpush1.bf16.msra.mxu0 0
    %145 = vmatprep.subr.bf16.mxu0 0
    %146 = vmatpush1.bf16.msra.mxu0 0
    %147 = vmatprep.subr.bf16.mxu0 0
    %148 = vmatpush1.bf16.msra.mxu0 0
    %149 = vmatprep.subr.bf16.mxu0 0
    %150 = vmatpush1.bf16.msra.mxu0 0
    %151 = vmatprep.subr.bf16.mxu0 0
    %152 = vmatpush1.bf16.msra.mxu0 0
    %153 = vmatprep.subr.bf16.mxu0 0
    %154 = vmatpush1.bf16.msra.mxu0 0
    %155 = vmatprep.mubr.bf16.mxu0 0
    %156 = vmatmul.mubr.bf16.gmra.mrb[0].mxu0 %v121
    %v157 = vpop.f32.mrb[0].mxu0
    %v158 = vadd.f32 %v92, %v157
    %v159 = vpop.f32.mrb[0].mxu0
    %v160 = vadd.f32 %v96, %v159
    %v161 = vpop.f32.mrb[0].mxu0
    %v162 = vpop.f32.mrb[0].mxu0
    %163 = vdwg.mxu0
    %v164 = vmax.f32 %v158, 0.0
    %v165 = vmax.f32 %v160, 0.0
    %v166 = vpack.c.bf16 %v164, %v164
    %v167 = vpack.c.bf16 %v165, %v165
    %v168 = vld [vmem:[#allocation7] sm:$0xf]
    %v169 = vld [vmem:[#allocation7 + $0x4] sm:$0xf]
    %v170 = vld [vmem:[#allocation7 + $0x8] sm:$0xf]
    %v171 = vld [vmem:[#allocation7 + $0xc] sm:$0xf]
    %v172 = vld [vmem:[#allocation7 + $0x10] sm:$0xf]
    %v173 = vld [vmem:[#allocation7 + $0x14] sm:$0xf]
    %v174 = vld [vmem:[#allocation7 + $0x18] sm:$0xf]
    %v175 = vld [vmem:[#allocation7 + $0x1c] sm:$0xf]
    %v176 = vld [vmem:[#allocation7 + $0x20] sm:$0xf]
    %v177 = vld [vmem:[#allocation7 + $0x24] sm:$0xf]
    %v178 = vld [vmem:[#allocation7 + $0x28] sm:$0xf]
    %v179 = vld [vmem:[#allocation7 + $0x2c] sm:$0xf]
    %v180 = vld [vmem:[#allocation7 + $0x30] sm:$0xf]
    %v181 = vld [vmem:[#allocation7 + $0x34] sm:$0xf]
    %v182 = vld [vmem:[#allocation7 + $0x38] sm:$0xf]
    %v183 = vld [vmem:[#allocation7 + $0x3c] sm:$0xf]
    %v184 = vld [vmem:[#allocation7 + $0x40] sm:$0xf]
    %v185 = vld [vmem:[#allocation7 + $0x44] sm:$0xf]
    %v186 = vld [vmem:[#allocation7 + $0x48] sm:$0xf]
    %v187 = vld [vmem:[#allocation7 + $0x4c] sm:$0xf]
    %v188 = vld [vmem:[#allocation7 + $0x50] sm:$0xf]
    %v189 = vld [vmem:[#allocation7 + $0x54] sm:$0xf]
    %v190 = vld [vmem:[#allocation7 + $0x58] sm:$0xf]
    %v191 = vld [vmem:[#allocation7 + $0x5c] sm:$0xf]
    %v192 = vld [vmem:[#allocation7 + $0x60] sm:$0xf]
    %v193 = vld [vmem:[#allocation7 + $0x64] sm:$0xf]
    %v194 = vld [vmem:[#allocation7 + $0x68] sm:$0xf]
    %v195 = vld [vmem:[#allocation7 + $0x6c] sm:$0xf]
    %v196 = vld [vmem:[#allocation7 + $0x70] sm:$0xf]
    %v197 = vld [vmem:[#allocation7 + $0x74] sm:$0xf]
    %v198 = vld [vmem:[#allocation7 + $0x78] sm:$0xf]
    %v199 = vld [vmem:[#allocation7 + $0x7c] sm:$0xf]
    %v200 = vld [vmem:[%s4] sm:$0x1]
    %v202 = vlaneseq
    %v203 = vshrl.u32 %v202, 7
    %v204 = vsub.s32 0, %v203
    %v205 = vrot.slane %v200, %v204
    %v239 = vunpack.c.l.b16 %v168
    %v240 = vunpack.c.l.b16 %v169
    %v241 = vunpack.c.l.b16 %v170
    %v242 = vunpack.c.l.b16 %v171
    %v243 = vunpack.c.l.b16 %v172
    %v244 = vunpack.c.l.b16 %v173
    %v245 = vunpack.c.l.b16 %v174
    %v246 = vunpack.c.l.b16 %v175
    %v247 = vunpack.c.l.b16 %v176
    %v248 = vunpack.c.l.b16 %v177
    %v249 = vunpack.c.l.b16 %v178
    %v250 = vunpack.c.l.b16 %v179
    %v251 = vunpack.c.l.b16 %v180
    %v252 = vunpack.c.l.b16 %v181
    %v253 = vunpack.c.l.b16 %v182
    %v254 = vunpack.c.l.b16 %v183
    %v255 = vunpack.c.l.b16 %v184
    %v256 = vunpack.c.l.b16 %v185
    %v257 = vunpack.c.l.b16 %v186
    %v258 = vunpack.c.l.b16 %v187
    %v259 = vunpack.c.l.b16 %v188
    %v260 = vunpack.c.l.b16 %v189
    %v261 = vunpack.c.l.b16 %v190
    %v262 = vunpack.c.l.b16 %v191
    %v263 = vunpack.c.l.b16 %v192
    %v264 = vunpack.c.l.b16 %v193
    %v265 = vunpack.c.l.b16 %v194
    %v266 = vunpack.c.l.b16 %v195
    %v267 = vunpack.c.l.b16 %v196
    %v268 = vunpack.c.l.b16 %v197
    %v269 = vunpack.c.l.b16 %v198
    %v270 = vunpack.c.l.b16 %v199
    %v271 = vpack.c.b16 %v240, %v239
    %v272 = vpack.c.b16 %v242, %v241
    %v273 = vpack.c.b16 %v244, %v243
    %v274 = vpack.c.b16 %v246, %v245
    %v275 = vpack.c.b16 %v248, %v247
    %v276 = vpack.c.b16 %v250, %v249
    %v277 = vpack.c.b16 %v252, %v251
    %v278 = vpack.c.b16 %v254, %v253
    %v279 = vpack.c.b16 %v256, %v255
    %v280 = vpack.c.b16 %v258, %v257
    %v281 = vpack.c.b16 %v260, %v259
    %v282 = vpack.c.b16 %v262, %v261
    %v283 = vpack.c.b16 %v264, %v263
    %v284 = vpack.c.b16 %v266, %v265
    %v285 = vpack.c.b16 %v268, %v267
    %v286 = vpack.c.b16 %v270, %v269
    %303 = vmatprep.subr.bf16.mxu0 0
    %304 = vmatpush1.bf16.msra.mxu0 %v271
    %305 = vmatprep.subr.bf16.mxu0 0
    %306 = vmatpush1.bf16.msra.mxu0 %v272
    %307 = vmatprep.subr.bf16.mxu0 0
    %308 = vmatpush1.bf16.msra.mxu0 %v273
    %309 = vmatprep.subr.bf16.mxu0 0
    %310 = vmatpush1.bf16.msra.mxu0 %v274
    %311 = vmatprep.subr.bf16.mxu0 0
    %312 = vmatpush1.bf16.msra.mxu0 %v275
    %313 = vmatprep.subr.bf16.mxu0 0
    %314 = vmatpush1.bf16.msra.mxu0 %v276
    %315 = vmatprep.subr.bf16.mxu0 0
    %316 = vmatpush1.bf16.msra.mxu0 %v277
    %317 = vmatprep.subr.bf16.mxu0 0
    %318 = vmatpush1.bf16.msra.mxu0 %v278
    %319 = vmatprep.subr.bf16.mxu0 0
    %320 = vmatpush1.bf16.msra.mxu0 %v279
    %321 = vmatprep.subr.bf16.mxu0 0
    %322 = vmatpush1.bf16.msra.mxu0 %v280
    %323 = vmatprep.subr.bf16.mxu0 0
    %324 = vmatpush1.bf16.msra.mxu0 %v281
    %325 = vmatprep.subr.bf16.mxu0 0
    %326 = vmatpush1.bf16.msra.mxu0 %v282
    %327 = vmatprep.subr.bf16.mxu0 0
    %328 = vmatpush1.bf16.msra.mxu0 %v283
    %329 = vmatprep.subr.bf16.mxu0 0
    %330 = vmatpush1.bf16.msra.mxu0 %v284
    %331 = vmatprep.subr.bf16.mxu0 0
    %332 = vmatpush1.bf16.msra.mxu0 %v285
    %333 = vmatprep.subr.bf16.mxu0 0
    %334 = vmatpush1.bf16.msra.mxu0 %v286
    %335 = vmatprep.mubr.bf16.mxu0 %v167
    %336 = vmatmul.mubr.bf16.gmra.mrb[0].mxu0 %v166
    %v337 = vpop.f32.mrb[0].mxu0
    %v338 = vadd.f32 %v205, %v337
    %v339 = vpop.f32.mrb[0].mxu0
    %v340 = vpop.f32.mrb[0].mxu0
    %v341 = vpop.f32.mrb[0].mxu0
    %342 = vdwg.mxu0
    %v343 = vmax.f32 %v338, 0.0
    %v344 = vpack.c.bf16 %v343, %v343
    %v345 = vld [vmem:[#allocation8] sm:$0xf]
    %v346 = vld [vmem:[#allocation8 + $0x4] sm:$0xf]
    %v347 = vld [vmem:[#allocation8 + $0x8] sm:$0xf]
    %v348 = vld [vmem:[#allocation8 + $0xc] sm:$0xf]
    %v349 = vld [vmem:[#allocation8 + $0x10] sm:$0xf]
    %v350 = vld [vmem:[#allocation8 + $0x14] sm:$0xf]
    %v351 = vld [vmem:[#allocation8 + $0x18] sm:$0xf]
    %v352 = vld [vmem:[#allocation8 + $0x1c] sm:$0xf]
    %v353 = vld [vmem:[#allocation8 + $0x20] sm:$0xf]
    %v354 = vld [vmem:[#allocation8 + $0x24] sm:$0xf]
    %v355 = vld [vmem:[#allocation8 + $0x28] sm:$0xf]
    %v356 = vld [vmem:[#allocation8 + $0x2c] sm:$0xf]
    %v357 = vld [vmem:[#allocation8 + $0x30] sm:$0xf]
    %v358 = vld [vmem:[#allocation8 + $0x34] sm:$0xf]
    %v359 = vld [vmem:[#allocation8 + $0x38] sm:$0xf]
    %v360 = vld [vmem:[#allocation8 + $0x3c] sm:$0xf]
    %v361 = vld [vmem:[%s6] sm:$0x1]
    %v363 = vlaneseq
    %v364 = vshrl.u32 %v363, 7
    %v365 = vsub.s32 0, %v364
    %v366 = vrot.slane %v361, %v365
    %v384 = vunpack.c.l.b16 %v345
    %v385 = vunpack.c.l.b16 %v346
    %v386 = vunpack.c.l.b16 %v347
    %v387 = vunpack.c.l.b16 %v348
    %v388 = vunpack.c.l.b16 %v349
    %v389 = vunpack.c.l.b16 %v350
    %v390 = vunpack.c.l.b16 %v351
    %v391 = vunpack.c.l.b16 %v352
    %v392 = vunpack.c.l.b16 %v353
    %v393 = vunpack.c.l.b16 %v354
    %v394 = vunpack.c.l.b16 %v355
    %v395 = vunpack.c.l.b16 %v356
    %v396 = vunpack.c.l.b16 %v357
    %v397 = vunpack.c.l.b16 %v358
    %v398 = vunpack.c.l.b16 %v359
    %v399 = vunpack.c.l.b16 %v360
    %v400 = vpack.c.b16 %v385, %v384
    %v401 = vpack.c.b16 %v387, %v386
    %v402 = vpack.c.b16 %v389, %v388
    %v403 = vpack.c.b16 %v391, %v390
    %v404 = vpack.c.b16 %v393, %v392
    %v405 = vpack.c.b16 %v395, %v394
    %v406 = vpack.c.b16 %v397, %v396
    %v407 = vpack.c.b16 %v399, %v398
    %416 = vmatprep.subr.bf16.mxu0 0
    %417 = vmatpush1.bf16.msra.mxu0 %v400
    %418 = vmatprep.subr.bf16.mxu0 0
    %419 = vmatpush1.bf16.msra.mxu0 %v401
    %420 = vmatprep.subr.bf16.mxu0 0
    %421 = vmatpush1.bf16.msra.mxu0 %v402
    %422 = vmatprep.subr.bf16.mxu0 0
    %423 = vmatpush1.bf16.msra.mxu0 %v403
    %424 = vmatprep.subr.bf16.mxu0 0
    %425 = vmatpush1.bf16.msra.mxu0 %v404
    %426 = vmatprep.subr.bf16.mxu0 0
    %427 = vmatpush1.bf16.msra.mxu0 %v405
    %428 = vmatprep.subr.bf16.mxu0 0
    %429 = vmatpush1.bf16.msra.mxu0 %v406
    %430 = vmatprep.subr.bf16.mxu0 0
    %431 = vmatpush1.bf16.msra.mxu0 %v407
    %432 = vmatprep.subr.bf16.mxu0 0
    %433 = vmatpush1.bf16.msra.mxu0 0
    %434 = vmatprep.subr.bf16.mxu0 0
    %435 = vmatpush1.bf16.msra.mxu0 0
    %436 = vmatprep.subr.bf16.mxu0 0
    %437 = vmatpush1.bf16.msra.mxu0 0
    %438 = vmatprep.subr.bf16.mxu0 0
    %439 = vmatpush1.bf16.msra.mxu0 0
    %440 = vmatprep.subr.bf16.mxu0 0
    %441 = vmatpush1.bf16.msra.mxu0 0
    %442 = vmatprep.subr.bf16.mxu0 0
    %443 = vmatpush1.bf16.msra.mxu0 0
    %444 = vmatprep.subr.bf16.mxu0 0
    %445 = vmatpush1.bf16.msra.mxu0 0
    %446 = vmatprep.subr.bf16.mxu0 0
    %447 = vmatpush1.bf16.msra.mxu0 0
    %448 = vmatprep.mubr.bf16.mxu0 0
    %449 = vmatmul.mubr.bf16.gmra.mrb[0].mxu0 %v344
    %v450 = vpop.f32.mrb[0].mxu0
    %v451 = vadd.f32 %v366, %v450
    %v452 = vpop.f32.mrb[0].mxu0
    %v453 = vpop.f32.mrb[0].mxu0
    %v454 = vpop.f32.mrb[0].mxu0
    %455 = vdwg.mxu0
    %456 = vst [vmem:[#allocation10] sm:$0xff] %v451
    // Predicated region
    $region46: #{mlp_forward.1} parent=1 // pred_check
      _
    $region47: #{mlp_forward.1} parent=1 // pred_check_branch
      %458 = sbr.rel (0) target = $region49
    $region48: #{mlp_forward.1} parent=1 // pred_region
      %s460 = ssub.s32 128, 128
      %461 = vsyncadd [#allocation4], %s460
      %s463 = sshll.u32 [#allocation10], 4
      %s464 = int_to_ptr.vmem [resolvable:$true] %s463
      %466 = dma.vmem_to_hbm [thread:$0]  %s464, 128, %s7, [#allocation4]
    $region49: #{mlp_forward.1} parent=1 // pred_fallthru
      _
    // Predicated region
    $region50: #{mlp_forward.1} parent=1 // pred_check
      _
    $region51: #{mlp_forward.1} parent=1 // pred_check_branch
      %468 = sbr.rel (0) target = $region53
    $region52: #{mlp_forward.1} parent=1 // pred_region
      %469 = dma.done [#allocation4], 128
    $region53: #{mlp_forward.1} parent=1 // pred_fallthru
      _
    %470 = vsyncpa [#allocation3], 1
    %471 = vsyncpa [#allocation6], 1
    %472 = vsyncpa [#allocation9], 1
    %473 = vsyncpa [#allocation4], 1

</llo_original>
